<compile_context>
chip_gen: v7x
topology: tpu7x:2x2x1
jax: 0.10.0
libtpu: 0.0.40
codegen_flags: <defaults>
</compile_context>

<pallas_src>
import functools

import jax
import jax.numpy as jnp
import numpy as np
from jax.experimental import pallas as pl
from jax.experimental.pallas import tpu as pltpu


# ----------------------------------------------------------------------------
# Pallas kernel: one grid step == one batch tile of BM rows, fully fused step.
# ----------------------------------------------------------------------------
def vanilla_rnn_kernel(
    dt_over_tau,
    # per-batch-tile inputs, blocks of shape (BM, dim)
    x_ref, r_ref, u_ref,
    # weights, full VMEM-resident blocks (constant index_map)
    jt_ref,    # (N, N)    = J.T  -> rec_drive = r @ J.T
    win_ref,   # (D_in, N) = all input-source weights stacked along D_in
    # outputs, blocks of shape (BM, N)
    x_out_ref, r_out_ref,
):
    x = x_ref[...]                      # (BM, N)
    r = r_ref[...]                      # (BM, N)
    u = u_ref[...]                      # (BM, D_in)

    # Dense batched MXU matmuls (M = BM rows per grid step).
    rec_drive = jnp.dot(r, jt_ref[...], preferred_element_type=jnp.float32)   # (BM, N)
    inp_drive = jnp.dot(u, win_ref[...], preferred_element_type=jnp.float32)  # (BM, N)

    # Leaky-integrator state update (VPU) + nonlinearity (EUP).
    x_new = x + dt_over_tau * (-x + rec_drive + inp_drive)
    r_new = jnp.tanh(x_new)             # TODO(synk): assumed default non_linearity

    x_out_ref[...] = x_new
    r_out_ref[...] = r_new


# ----------------------------------------------------------------------------
# Wrapper: input-source concat, batch padding, BlockSpecs / grid.
# ----------------------------------------------------------------------------
def vanilla_rnn_forward(params, rnn_inputs, x, r, *, dt=0.05, tau=0.15, block_b=8):
    """One VanillaRNN step.

    params      : {"jt": (N, N) = J.T, "win": {source_name: (d_s, N)}}
    rnn_inputs  : {source_name: (B, d_s)}
    x, r        : (B, N) hidden state / rates (r = phi(x) from the previous step)
    block_b     : batch-tile rows per grid step; multiple of 8 (f32 sublane).
                  For large B prefer 128 (v5e) / 256 (v6e, v7x).
    """
    B, N = x.shape

    # Concatenate all input sources into one (B, D_in) operand and one (D_in, N) weight
    # so the kernel does a single dense input matmul.
    names = sorted(rnn_inputs)
    u = jnp.concatenate([rnn_inputs[k].astype(jnp.float32) for k in names], axis=-1)
    win = jnp.concatenate([params["win"][k] for k in names], axis=0)
    d_in = u.shape[-1]

    # Pad batch to a multiple of block_b (padded rows are discarded at the end).
    b_pad = pl.cdiv(B, block_b) * block_b
    if b_pad != B:
        pad = ((0, b_pad - B), (0, 0))
        x = jnp.pad(x, pad)
        r = jnp.pad(r, pad)
        u = jnp.pad(u, pad)

    grid = (b_pad // block_b,)

    def per_batch(dim):
        return pl.BlockSpec((block_b, dim), lambda i: (i, 0))

    def full2d(w):
        return pl.BlockSpec(w.shape, lambda i: (0, 0))

    kernel = functools.partial(vanilla_rnn_kernel, float(dt) / float(tau))

    x_new, r_new = pl.pallas_call(
        kernel,
        grid=grid,
        in_specs=[
            per_batch(N),          # x
            per_batch(N),          # r
            per_batch(d_in),       # u (concatenated sources)
            full2d(params["jt"]),  # J.T
            full2d(win),           # stacked input weights
        ],
        out_specs=[per_batch(N), per_batch(N)],
        out_shape=[
            jax.ShapeDtypeStruct((b_pad, N), jnp.float32),
            jax.ShapeDtypeStruct((b_pad, N), jnp.float32),
        ],
        compiler_params=pltpu.CompilerParams(
            dimension_semantics=("parallel",)),
    )(x, r, u, params["jt"], win)

    return {
        "r_hidden": x_new[:B],   # pre-activation hidden state x'
        "r_act": r_new[:B],      # firing rates r' = tanh(x')
    }


# ----------------------------------------------------------------------------
# Deterministic parameter initialization (shapes follow the module __init__).
# ----------------------------------------------------------------------------
def init_params(key, *, nneurons=128, input_sources=None, g0=1.2):
    input_sources = dict(input_sources or {})
    N = nneurons
    keys = jax.random.split(key, len(input_sources) + 1)

    J = (g0 / np.sqrt(N)) * jax.random.normal(keys[0], (N, N), jnp.float32)
    win = {}
    for k_src, (name, dim) in zip(keys[1:], sorted(input_sources.items())):
        win[name] = ((1.0 / np.sqrt(dim)) *
                     jax.random.normal(k_src, (dim, N), jnp.float32))
    return {"jt": jnp.asarray(J.T), "win": win}


# ----------------------------------------------------------------------------
# Pure-JAX reference for a correctness sanity check.
# ----------------------------------------------------------------------------
def vanilla_rnn_reference(params, rnn_inputs, x, r, *, dt=0.05, tau=0.15):
    names = sorted(rnn_inputs)
    u = jnp.concatenate([rnn_inputs[k] for k in names], axis=-1)
    win = jnp.concatenate([params["win"][k] for k in names], axis=0)
    rec = jnp.dot(r, params["jt"], precision=jax.lax.Precision.HIGHEST)
    inp = jnp.dot(u, win, precision=jax.lax.Precision.HIGHEST)
    x_new = x + (dt / tau) * (-x + rec + inp)
    return {"r_hidden": x_new, "r_act": jnp.tanh(x_new)}


if __name__ == "__main__":
    B, N = 16, 128                 # small, but 2 batch tiles of 8 rows -> 2-step grid
    DT, TAU, G0 = 0.05, 0.15, 1.2
    INPUT_SOURCES = {"go": 8, "context": 1}   # name -> input dim

    key = jax.random.PRNGKey(0)
    kp, kx, kg, kc = jax.random.split(key, 4)

    params = init_params(kp, nneurons=N, input_sources=INPUT_SOURCES, g0=G0)

    x0 = 0.5 * jax.random.normal(kx, (B, N), jnp.float32)   # hidden state
    r0 = jnp.tanh(x0)                                       # current firing rates
    rnn_inputs = {
        "go": jax.random.normal(kg, (B, INPUT_SOURCES["go"]), jnp.float32),
        "context": jax.random.normal(kc, (B, INPUT_SOURCES["context"]), jnp.float32),
    }

    out = vanilla_rnn_forward(params, rnn_inputs, x0, r0, dt=DT, tau=TAU, block_b=8)
    jax.block_until_ready(out)

    assert out["r_hidden"].shape == (B, N)
    assert out["r_act"].shape == (B, N)
    assert bool(jnp.all(jnp.isfinite(out["r_hidden"])))
    assert bool(jnp.all(jnp.isfinite(out["r_act"])))

    ref = vanilla_rnn_reference(params, rnn_inputs, x0, r0, dt=DT, tau=TAU)
    np.testing.assert_allclose(np.asarray(out["r_hidden"]),
                               np.asarray(ref["r_hidden"]), rtol=5e-2, atol=5e-2)
    np.testing.assert_allclose(np.asarray(out["r_act"]),
                               np.asarray(ref["r_act"]), rtol=5e-2, atol=5e-2)

    print("KERNEL_OK")
</pallas_src>

<mosaic_0001>
module attributes {stable_mosaic.version = 11 : i64} {
  func.func @vanilla_rnn_kernel(%arg0: i32, %arg1: memref<8x128xf32, #tpu.memory_space<vmem>>, %arg2: memref<8x128xf32, #tpu.memory_space<vmem>>, %arg3: memref<8x9xf32, #tpu.memory_space<vmem>>, %arg4: memref<128x128xf32, #tpu.memory_space<vmem>>, %arg5: memref<9x128xf32, #tpu.memory_space<vmem>>, %arg6: memref<8x128xf32, #tpu.memory_space<vmem>>, %arg7: memref<8x128xf32, #tpu.memory_space<vmem>>) attributes {dimension_semantics = [#tpu.dimension_semantics<parallel>], iteration_bounds = array<i64: 2>, scalar_prefetch = 0 : i64, scratch_operands = 0 : i64, tpu.core_type = #tpu.core_type<tc>, window_params = [{transform_indices = @transform_0, window_bounds = array<i64: 8, 128>}, {transform_indices = @transform_1, window_bounds = array<i64: 8, 128>}, {transform_indices = @transform_2, window_bounds = array<i64: 8, 9>}, {pipeline_mode = #tpu.pipeline_mode<synchronous>, transform_indices = @transform_3, window_bounds = array<i64: 128, 128>}, {pipeline_mode = #tpu.pipeline_mode<synchronous>, transform_indices = @transform_4, window_bounds = array<i64: 9, 128>}, {transform_indices = @transform_5, window_bounds = array<i64: 8, 128>}, {transform_indices = @transform_6, window_bounds = array<i64: 8, 128>}]} {
    %c0 = arith.constant 0 : index
    %c0_0 = arith.constant 0 : index
    %0 = vector.load %arg1[%c0, %c0_0] : memref<8x128xf32, #tpu.memory_space<vmem>>, vector<8x128xf32>
    %c0_1 = arith.constant 0 : index
    %c0_2 = arith.constant 0 : index
    %1 = vector.load %arg2[%c0_1, %c0_2] : memref<8x128xf32, #tpu.memory_space<vmem>>, vector<8x128xf32>
    %c0_3 = arith.constant 0 : index
    %c0_4 = arith.constant 0 : index
    %2 = vector.load %arg3[%c0_3, %c0_4] : memref<8x9xf32, #tpu.memory_space<vmem>>, vector<8x9xf32>
    %c0_5 = arith.constant 0 : index
    %c0_6 = arith.constant 0 : index
    %3 = vector.load %arg4[%c0_5, %c0_6] : memref<128x128xf32, #tpu.memory_space<vmem>>, vector<128x128xf32>
    %cst = arith.constant dense<0.000000e+00> : vector<8x128xf32>
    %4 = tpu.matmul %1, %3, %cst {dimension_numbers = #tpu.dot_dimension_numbers<[1], [0], [0], [1], [0, 0, 1, 1], [], []>} : vector<8x128xf32>, vector<128x128xf32>, vector<8x128xf32> -> vector<8x128xf32>
    %c0_7 = arith.constant 0 : index
    %c0_8 = arith.constant 0 : index
    %5 = vector.load %arg5[%c0_7, %c0_8] : memref<9x128xf32, #tpu.memory_space<vmem>>, vector<9x128xf32>
    %cst_9 = arith.constant dense<0.000000e+00> : vector<8x128xf32>
    %6 = tpu.matmul %2, %5, %cst_9 {dimension_numbers = #tpu.dot_dimension_numbers<[1], [0], [0], [1], [0, 0, 1, 1], [], []>} : vector<8x9xf32>, vector<9x128xf32>, vector<8x128xf32> -> vector<8x128xf32>
    %cst_10 = arith.constant 0.000000e+00 : f32
    %7 = vector.broadcast %cst_10 : f32 to vector<8x128xf32>
    %8 = arith.subf %7, %0 : vector<8x128xf32>
    %9 = arith.addf %8, %4 : vector<8x128xf32>
    %10 = arith.addf %9, %6 : vector<8x128xf32>
    %cst_11 = arith.constant 0.333333343 : f32
    %11 = vector.broadcast %cst_11 : f32 to vector<8x128xf32>
    %12 = arith.mulf %11, %10 : vector<8x128xf32>
    %13 = arith.addf %0, %12 : vector<8x128xf32>
    %14 = math.tanh %13 : vector<8x128xf32>
    %c0_12 = arith.constant 0 : index
    %c0_13 = arith.constant 0 : index
    %15 = vector.load %arg6[%c0_12, %c0_13] : memref<8x128xf32, #tpu.memory_space<vmem>>, vector<8x128xf32>
    tpu.vector_store %arg6[%c0_12, %c0_13], %13 {strides = array<i32>} : memref<8x128xf32, #tpu.memory_space<vmem>>, vector<8x128xf32>,
    %c0_14 = arith.constant 0 : index
    %c0_15 = arith.constant 0 : index
    %16 = vector.load %arg7[%c0_14, %c0_15] : memref<8x128xf32, #tpu.memory_space<vmem>>, vector<8x128xf32>
    tpu.vector_store %arg7[%c0_14, %c0_15], %14 {strides = array<i32>} : memref<8x128xf32, #tpu.memory_space<vmem>>, vector<8x128xf32>,
    return
  }
  func.func @transform_0(%arg0: i32) -> (i32, i32) {
    %c0_i32 = arith.constant 0 : i32
    %c0_i32_0 = arith.constant 0 : i32
    return %arg0, %c0_i32 : i32, i32
  }
  func.func @transform_1(%arg0: i32) -> (i32, i32) {
    %c0_i32 = arith.constant 0 : i32
    %c0_i32_0 = arith.constant 0 : i32
    return %arg0, %c0_i32 : i32, i32
  }
  func.func @transform_2(%arg0: i32) -> (i32, i32) {
    %c0_i32 = arith.constant 0 : i32
    %c0_i32_0 = arith.constant 0 : i32
    return %arg0, %c0_i32 : i32, i32
  }
  func.func @transform_3(%arg0: i32) -> (i32, i32) {
    %c0_i32 = arith.constant 0 : i32
    %c0_i32_0 = arith.constant 0 : i32
    %c0_i32_1 = arith.constant 0 : i32
    return %c0_i32, %c0_i32_0 : i32, i32
  }
  func.func @transform_4(%arg0: i32) -> (i32, i32) {
    %c0_i32 = arith.constant 0 : i32
    %c0_i32_0 = arith.constant 0 : i32
    %c0_i32_1 = arith.constant 0 : i32
    return %c0_i32, %c0_i32_0 : i32, i32
  }
  func.func @transform_5(%arg0: i32) -> (i32, i32) {
    %c0_i32 = arith.constant 0 : i32
    %c0_i32_0 = arith.constant 0 : i32
    return %arg0, %c0_i32 : i32, i32
  }
  func.func @transform_6(%arg0: i32) -> (i32, i32) {
    %c0_i32 = arith.constant 0 : i32
    %c0_i32_0 = arith.constant 0 : i32
    return %arg0, %c0_i32 : i32, i32
  }
}

</mosaic_0001>

<llo_original>
// kernel: tpu_custom_call.1
$region0: #{tpu_custom_call.1}
  #allocation0 [shape = 'u32[]', space=smem, size = 0x4, offset = 0x4, fixed_abs, tag = 'smem constant byte address 0x4 - core index']
  #allocation1 [shape = 'u32[144,128]{1,0:T(1,128)}', space=vmem, size = 0x12000, scoped, tag = 'internal scratch']
  %s0 = inlined_call_operand.hbm [shape: f32[16,128], index: 0, kind: input, shape index: {}]
  %s1 = inlined_call_operand.hbm [shape: f32[16,128], index: 1, kind: input, shape index: {}]
  %s2 = inlined_call_operand.hbm [shape: f32[16,9], index: 2, kind: input, shape index: {}]
  %s3 = inlined_call_operand.hbm [shape: f32[128,128], index: 3, kind: input, shape index: {}]
  %s4 = inlined_call_operand.hbm [shape: f32[9,128], index: 4, kind: input, shape index: {}]
  %s5 = inlined_call_operand.hbm [shape: f32[16,128], index: 5, kind: output, shape index: {0}]
  %s6 = inlined_call_operand.hbm [shape: f32[16,128], index: 6, kind: output, shape index: {1}]
  %7 = xla_tuple %s5, %s6
  %s8 = sld [smem:[#allocation0]]
  $region81: #{tpu_custom_call.1} parent=0
    _
  %s10 = ssub.s32 1, %s8
  %s11 = scalar_select 0, %s10, %s8
  $region1: #{tpu_custom_call.1} parent=0
    #allocation2 [shape = 'u8[8192]{0}', space=vmem, size = 0x2000, scoped, tag = 'input window, operand 0']
    #allocation3 [shape = 's32[2]{0}', space=sflag, size = 0x8, scoped, tag = 'scoped memory for tpu_custom_call.1']
    #allocation4 [shape = 's32[2]{0}', space=sflag, size = 0x8, scoped, tag = 'scoped memory for tpu_custom_call.1']
    #allocation5 [shape = 'u8[8192]{0}', space=vmem, size = 0x2000, scoped, tag = 'input window, operand 1']
    #allocation6 [shape = 's32[2]{0}', space=sflag, size = 0x8, scoped, tag = 'scoped memory for tpu_custom_call.1']
    #allocation7 [shape = 'u8[8192]{0}', space=vmem, size = 0x2000, scoped, tag = 'input window, operand 2']
    #allocation8 [shape = 'u8[65536]{0}', space=vmem, size = 0x10000, scoped, tag = 'input window, operand 3, single buffered']
    #allocation9 [shape = 's32[1]{0}', space=sflag, size = 0x4, scoped, tag = 'scoped memory for tpu_custom_call.1']
    #allocation10 [shape = 'u8[8192]{0}', space=vmem, size = 0x2000, scoped, tag = 'input window, operand 4, single buffered']
    #allocation11 [shape = 'u8[8192]{0}', space=vmem, size = 0x2000, scoped, tag = 'output window, operand 0']
    #allocation12 [shape = 'u8[8192]{0}', space=vmem, size = 0x2000, scoped, tag = 'output window, operand 1']
    #allocation13 [shape = 's32[2]{0}', space=sflag, size = 0x8, scoped, tag = 'scoped memory for tpu_custom_call.1']
    %12 = vsyncpa [#allocation3], 0
    %s13 = scalar_lea.sflag [#allocation3], 1
    %14 = vsyncpa %s13, 0
    %15 = vsyncpa [#allocation6], 0
    %s16 = scalar_lea.sflag [#allocation6], 1
    %17 = vsyncpa %s16, 0
    %18 = vsyncpa [#allocation9], 0
    %19 = vsyncpa [#allocation4], 0
    %s20 = scalar_lea.sflag [#allocation4], 1
    %21 = vsyncpa %s20, 0
    %22 = vsyncpa [#allocation13], 0
    %s23 = scalar_lea.sflag [#allocation13], 1
    %24 = vsyncpa %s23, 0
    loop: start=0, step=1, limit=4
    $region2: #{tpu_custom_call.1} parent=1 // loop_pre_header
      _
    $region3: #{tpu_custom_call.1} parent=1 // loop_header
      %s26 = sphi 0, %s30
      %p27 = scmp.ge.s32.totalorder %s26, 4
      %s36 = sphi 0, %s38
      %s39 = sphi 0, %s36
      %s40 = sphi 0, %s39
      %s56 = sphi 0, %s40
      %s62 = sphi 0, %s64
      %s65 = sphi 0, %s62
      %s66 = sphi 0, %s65
      %s82 = sphi 0, %s66
      %s88 = sphi 0, %s90
      %s91 = sphi 0, %s88
      %s92 = sphi 0, %s91
      %s108 = sphi 0, %s92
      %s112 = sphi 0, %s112
      %s114 = sphi 0, %s112
      %s115 = sphi 0, %s114
      %s129 = sphi 0, %s115
      %s133 = sphi 0, %s133
      %s135 = sphi 0, %s133
      %s136 = sphi 0, %s135
      %s150 = sphi 0, %s136
      %s156 = sphi 0, %s158
      %s159 = sphi 0, %s156
      %s160 = sphi 0, %s159
      %s176 = sphi 0, %s160
      %s182 = sphi 0, %s184
      %s185 = sphi 0, %s182
      %s186 = sphi 0, %s185
      %s202 = sphi 0, %s186
    $region4: #{tpu_custom_call.1} parent=1 // loop_header_branch
      %29 = sbr.rel (%p27) target = $region8
    $region5: #{tpu_custom_call.1} parent=1 // loop_body
      %s31 = ssub.s32 %s26, 1
      %s32 = ssub.s32 %s26, 2
      %s33 = sadd.s32 %s26, 1
      %s34 = ssub.s32 %s26, %s33
      %p35 = scmp.eq.s32.totalorder %s34, 0
      %s37 = sadd.s32 %s36, 1
      %s38 = scalar_select %p35, %s36, %s37
      %p41 = pneg %p35
      %p42 = scmp.eq.s32.totalorder %s26, 1
      %p43 = por %p41, %p42
      %p44 = scmp.ne.s32.totalorder %s36, %s39
      %p45 = scmp.eq.s32.totalorder %s26, 0
      %p46 = por %p44, %p45
      %p47 = scmp.ne.s32.totalorder %s36, %s39
      %p48 = scmp.eq.s32.totalorder %s31, 1
      %p49 = por %p47, %p48
      %p50 = scmp.ne.s32.totalorder %s39, %s40
      %p51 = scmp.eq.s32.totalorder %s31, 0
      %p52 = por %p50, %p51
      %p53 = scmp.ne.s32.totalorder %s39, %s40
      %p54 = scmp.eq.s32.totalorder %s32, 1
      %p55 = por %p53, %p54
      %p57 = scmp.ne.s32.totalorder %s40, %s56
      %p58 = scmp.eq.s32.totalorder %s32, 0
      %p59 = por %p57, %p58
      %s60 = ssub.s32 %s26, %s33
      %p61 = scmp.eq.s32.totalorder %s60, 0
      %s63 = sadd.s32 %s62, 1
      %s64 = scalar_select %p61, %s62, %s63
      %p67 = pneg %p61
      %p68 = scmp.eq.s32.totalorder %s26, 1
      %p69 = por %p67, %p68
      %p70 = scmp.ne.s32.totalorder %s62, %s65
      %p71 = scmp.eq.s32.totalorder %s26, 0
      %p72 = por %p70, %p71
      %p73 = scmp.ne.s32.totalorder %s62, %s65
      %p74 = scmp.eq.s32.totalorder %s31, 1
      %p75 = por %p73, %p74
      %p76 = scmp.ne.s32.totalorder %s65, %s66
      %p77 = scmp.eq.s32.totalorder %s31, 0
      %p78 = por %p76, %p77
      %p79 = scmp.ne.s32.totalorder %s65, %s66
      %p80 = scmp.eq.s32.totalorder %s32, 1
      %p81 = por %p79, %p80
      %p83 = scmp.ne.s32.totalorder %s66, %s82
      %p84 = scmp.eq.s32.totalorder %s32, 0
      %p85 = por %p83, %p84
      %s86 = ssub.s32 %s26, %s33
      %p87 = scmp.eq.s32.totalorder %s86, 0
      %s89 = sadd.s32 %s88, 1
      %s90 = scalar_select %p87, %s88, %s89
      %p93 = pneg %p87
      %p94 = scmp.eq.s32.totalorder %s26, 1
      %p95 = por %p93, %p94
      %p96 = scmp.ne.s32.totalorder %s88, %s91
      %p97 = scmp.eq.s32.totalorder %s26, 0
      %p98 = por %p96, %p97
      %p99 = scmp.ne.s32.totalorder %s88, %s91
      %p100 = scmp.eq.s32.totalorder %s31, 1
      %p101 = por %p99, %p100
      %p102 = scmp.ne.s32.totalorder %s91, %s92
      %p103 = scmp.eq.s32.totalorder %s31, 0
      %p104 = por %p102, %p103
      %p105 = scmp.ne.s32.totalorder %s91, %s92
      %p106 = scmp.eq.s32.totalorder %s32, 1
      %p107 = por %p105, %p106
      %p109 = scmp.ne.s32.totalorder %s92, %s108
      %p110 = scmp.eq.s32.totalorder %s32, 0
      %p111 = por %p109, %p110
      %s113 = sadd.s32 %s112, 1
      %p116 = scmp.eq.s32.totalorder %s26, 1
      %p117 = scmp.ne.s32.totalorder %s112, %s114
      %p118 = scmp.eq.s32.totalorder %s26, 0
      %p119 = por %p117, %p118
      %p120 = scmp.ne.s32.totalorder %s112, %s114
      %p121 = scmp.eq.s32.totalorder %s31, 1
      %p122 = por %p120, %p121
      %p123 = scmp.ne.s32.totalorder %s114, %s115
      %p124 = scmp.eq.s32.totalorder %s31, 0
      %p125 = por %p123, %p124
      %p126 = scmp.ne.s32.totalorder %s114, %s115
      %p127 = scmp.eq.s32.totalorder %s32, 1
      %p128 = por %p126, %p127
      %p130 = scmp.ne.s32.totalorder %s115, %s129
      %p131 = scmp.eq.s32.totalorder %s32, 0
      %p132 = por %p130, %p131
      %s134 = sadd.s32 %s133, 1
      %p137 = scmp.eq.s32.totalorder %s26, 1
      %p138 = scmp.ne.s32.totalorder %s133, %s135
      %p139 = scmp.eq.s32.totalorder %s26, 0
      %p140 = por %p138, %p139
      %p141 = scmp.ne.s32.totalorder %s133, %s135
      %p142 = scmp.eq.s32.totalorder %s31, 1
      %p143 = por %p141, %p142
      %p144 = scmp.ne.s32.totalorder %s135, %s136
      %p145 = scmp.eq.s32.totalorder %s31, 0
      %p146 = por %p144, %p145
      %p147 = scmp.ne.s32.totalorder %s135, %s136
      %p148 = scmp.eq.s32.totalorder %s32, 1
      %p149 = por %p147, %p148
      %p151 = scmp.ne.s32.totalorder %s136, %s150
      %p152 = scmp.eq.s32.totalorder %s32, 0
      %p153 = por %p151, %p152
      %s154 = ssub.s32 %s26, %s33
      %p155 = scmp.eq.s32.totalorder %s154, 0
      %s157 = sadd.s32 %s156, 1
      %s158 = scalar_select %p155, %s156, %s157
      %p161 = pneg %p155
      %p162 = scmp.eq.s32.totalorder %s26, 1
      %p163 = por %p161, %p162
      %p164 = scmp.ne.s32.totalorder %s156, %s159
      %p165 = scmp.eq.s32.totalorder %s26, 0
      %p166 = por %p164, %p165
      %p167 = scmp.ne.s32.totalorder %s156, %s159
      %p168 = scmp.eq.s32.totalorder %s31, 1
      %p169 = por %p167, %p168
      %p170 = scmp.ne.s32.totalorder %s159, %s160
      %p171 = scmp.eq.s32.totalorder %s31, 0
      %p172 = por %p170, %p171
      %p173 = scmp.ne.s32.totalorder %s159, %s160
      %p174 = scmp.eq.s32.totalorder %s32, 1
      %p175 = por %p173, %p174
      %p177 = scmp.ne.s32.totalorder %s160, %s176
      %p178 = scmp.eq.s32.totalorder %s32, 0
      %p179 = por %p177, %p178
      %s180 = ssub.s32 %s26, %s33
      %p181 = scmp.eq.s32.totalorder %s180, 0
      %s183 = sadd.s32 %s182, 1
      %s184 = scalar_select %p181, %s182, %s183
      %p187 = pneg %p181
      %p188 = scmp.eq.s32.totalorder %s26, 1
      %p189 = por %p187, %p188
      %p190 = scmp.ne.s32.totalorder %s182, %s185
      %p191 = scmp.eq.s32.totalorder %s26, 0
      %p192 = por %p190, %p191
      %p193 = scmp.ne.s32.totalorder %s182, %s185
      %p194 = scmp.eq.s32.totalorder %s31, 1
      %p195 = por %p193, %p194
      %p196 = scmp.ne.s32.totalorder %s185, %s186
      %p197 = scmp.eq.s32.totalorder %s31, 0
      %p198 = por %p196, %p197
      %p199 = scmp.ne.s32.totalorder %s185, %s186
      %p200 = scmp.eq.s32.totalorder %s32, 1
      %p201 = por %p199, %p200
      %p203 = scmp.ne.s32.totalorder %s186, %s202
      %p204 = scmp.eq.s32.totalorder %s32, 0
      %p205 = por %p203, %p204
      %p206 = scmp.le.s32.totalorder 1, %s26
      %p207 = scmp.lt.s32.totalorder %s26, 3
      %p208 = pnand %p206, %p207
      %p209 = pneg %p208
      // Predicated region
      $region9: #{tpu_custom_call.1} parent=5 // pred_check
        _
      $region10: #{tpu_custom_call.1} parent=5 // pred_check_branch
        %211 = sbr.rel (%p208) target = $region12
      $region11: #{tpu_custom_call.1} parent=5 // pred_region
        %s212 = ssub.s32 %s26, 1
        // Predicated region
        $region13: #{tpu_custom_call.1} parent=11 // pred_check
          %p213 = pneg %p125
        $region14: #{tpu_custom_call.1} parent=11 // pred_check_branch
          %215 = sbr.rel (%p213) target = $region16
        $region15: #{tpu_custom_call.1} parent=11 // pred_region
          %s217 = ssub.s32 2048, 2048
          %218 = vsyncadd [#allocation9], %s217
          %s219 = sshll.u32 [#allocation8], 4
          %s220 = int_to_ptr.vmem [resolvable:$true] %s219
          %225 = dma.hbm_to_vmem [thread:$0]  %s3, 2048, %s220, [#allocation9], 128, 128, 8
        $region16: #{tpu_custom_call.1} parent=11 // pred_fallthru
          _
        // Predicated region
        $region17: #{tpu_custom_call.1} parent=11 // pred_check
          %p226 = pneg %p146
        $region18: #{tpu_custom_call.1} parent=11 // pred_check_branch
          %228 = sbr.rel (%p226) target = $region20
        $region19: #{tpu_custom_call.1} parent=11 // pred_region
          %s230 = ssub.s32 256, 256
          %231 = vsyncadd [#allocation9], %s230
          %s232 = sshll.u32 [#allocation10], 4
          %s233 = int_to_ptr.vmem [resolvable:$true] %s232
          %238 = dma.hbm_to_vmem [thread:$0]  %s4, 256, %s233, [#allocation9], 128, 128, 8
        $region20: #{tpu_custom_call.1} parent=11 // pred_fallthru
          _
      $region12: #{tpu_custom_call.1} parent=5 // pred_fallthru
        _
      %p239 = scmp.lt.s32.totalorder %s26, 2
      // Predicated region
      $region21: #{tpu_custom_call.1} parent=5 // pred_check
        %p240 = pneg %p239
      $region22: #{tpu_custom_call.1} parent=5 // pred_check_branch
        %242 = sbr.rel (%p240) target = $region24
      $region23: #{tpu_custom_call.1} parent=5 // pred_region
        // Predicated region
        $region25: #{tpu_custom_call.1} parent=23 // pred_check
          %p243 = pneg %p46
        $region26: #{tpu_custom_call.1} parent=23 // pred_check_branch
          %245 = sbr.rel (%p243) target = $region28
        $region27: #{tpu_custom_call.1} parent=23 // pred_region
          %s246 = sand.u32 %s36, 1
          %s247 = scalar_lea.sflag [#allocation3], %s246
          %s248 = sand.u32 %s36, 1
          %s249 = smul.addr %s248, 8
          %s250 = scalar_lea.vmem [#allocation2], %s249
          %s252 = ssub.s32 128, 128
          %253 = vsyncadd %s247, %s252
          %s254 = smul.addr %s26, 128
          %s255 = scalar_lea.hbm %s0, %s254
          %s257 = sshll.u32 %s250, 4
          %s258 = int_to_ptr.vmem [resolvable:$true] %s257
          %260 = dma.hbm_to_vmem [thread:$0]  %s255, 128, %s258, %s247
        $region28: #{tpu_custom_call.1} parent=23 // pred_fallthru
          _
        // Predicated region
        $region29: #{tpu_custom_call.1} parent=23 // pred_check
          %p261 = pneg %p72
        $region30: #{tpu_custom_call.1} parent=23 // pred_check_branch
          %263 = sbr.rel (%p261) target = $region32
        $region31: #{tpu_custom_call.1} parent=23 // pred_region
          %s264 = sand.u32 %s26, 1
          %s265 = scalar_lea.sflag [#allocation6], %s264
          %s266 = sand.u32 %s62, 1
          %s267 = smul.addr %s266, 8
          %s268 = scalar_lea.vmem [#allocation5], %s267
          %s270 = ssub.s32 128, 128
          %271 = vsyncadd %s265, %s270
          %s272 = smul.addr %s26, 128
          %s273 = scalar_lea.hbm %s1, %s272
          %s275 = sshll.u32 %s268, 4
          %s276 = int_to_ptr.vmem [resolvable:$true] %s275
          %278 = dma.hbm_to_vmem [thread:$0]  %s273, 128, %s276, %s265
        $region32: #{tpu_custom_call.1} parent=23 // pred_fallthru
          _
        // Predicated region
        $region33: #{tpu_custom_call.1} parent=23 // pred_check
          %p279 = pneg %p98
        $region34: #{tpu_custom_call.1} parent=23 // pred_check_branch
          %281 = sbr.rel (%p279) target = $region36
        $region35: #{tpu_custom_call.1} parent=23 // pred_region
          %s282 = sand.u32 %s26, 1
          %s283 = scalar_lea.sflag [#allocation6], %s282
          %s284 = sand.u32 %s88, 1
          %s285 = smul.addr %s284, 8
          %s286 = scalar_lea.vmem [#allocation7], %s285
          %s288 = ssub.s32 128, 128
          %289 = vsyncadd %s283, %s288
          %s290 = smul.addr %s26, 128
          %s291 = scalar_lea.hbm %s2, %s290
          %s293 = sshll.u32 %s286, 4
          %s294 = int_to_ptr.vmem [resolvable:$true] %s293
          %296 = dma.hbm_to_vmem [thread:$0]  %s291, 128, %s294, %s283
        $region36: #{tpu_custom_call.1} parent=23 // pred_fallthru
          _
      $region24: #{tpu_custom_call.1} parent=5 // pred_fallthru
        _
      %p297 = scmp.le.s32.totalorder 1, %s26
      %p298 = scmp.lt.s32.totalorder %s26, 3
      %p299 = pnand %p297, %p298
      %p300 = pneg %p299
      // Predicated region
      $region37: #{tpu_custom_call.1} parent=5 // pred_check
        _
      $region38: #{tpu_custom_call.1} parent=5 // pred_check_branch
        %302 = sbr.rel (%p299) target = $region40
      $region39: #{tpu_custom_call.1} parent=5 // pred_region
        %s303 = ssub.s32 %s26, 1
        %s304 = sand.u32 %s39, 1
        %s305 = scalar_lea.sflag [#allocation3], %s304
        %s306 = sand.u32 %s39, 1
        %s307 = smul.addr %s306, 8
        %s308 = scalar_lea.vmem [#allocation2], %s307
        // Predicated region
        $region41: #{tpu_custom_call.1} parent=39 // pred_check
          %p309 = pneg %p52
        $region42: #{tpu_custom_call.1} parent=39 // pred_check_branch
          %311 = sbr.rel (%p309) target = $region44
        $region43: #{tpu_custom_call.1} parent=39 // pred_region
          %312 = dma.done %s305, 128
        $region44: #{tpu_custom_call.1} parent=39 // pred_fallthru
          _
        %s313 = sand.u32 %s31, 1
        %s314 = scalar_lea.sflag [#allocation6], %s313
        %s315 = sand.u32 %s65, 1
        %s316 = smul.addr %s315, 8
        %s317 = scalar_lea.vmem [#allocation5], %s316
        // Predicated region
        $region45: #{tpu_custom_call.1} parent=39 // pred_check
          %p318 = pneg %p78
        $region46: #{tpu_custom_call.1} parent=39 // pred_check_branch
          %320 = sbr.rel (%p318) target = $region48
        $region47: #{tpu_custom_call.1} parent=39 // pred_region
          %321 = dma.done %s314, 128
        $region48: #{tpu_custom_call.1} parent=39 // pred_fallthru
          _
        %s322 = sand.u32 %s31, 1
        %s323 = scalar_lea.sflag [#allocation6], %s322
        %s324 = sand.u32 %s91, 1
        %s325 = smul.addr %s324, 8
        %s326 = scalar_lea.vmem [#allocation7], %s325
        // Predicated region
        $region49: #{tpu_custom_call.1} parent=39 // pred_check
          %p327 = pneg %p104
        $region50: #{tpu_custom_call.1} parent=39 // pred_check_branch
          %329 = sbr.rel (%p327) target = $region52
        $region51: #{tpu_custom_call.1} parent=39 // pred_region
          %330 = dma.done %s323, 128
        $region52: #{tpu_custom_call.1} parent=39 // pred_fallthru
          _
        // Predicated region
        $region53: #{tpu_custom_call.1} parent=39 // pred_check
          %p331 = pneg %p125
        $region54: #{tpu_custom_call.1} parent=39 // pred_check_branch
          %333 = sbr.rel (%p331) target = $region56
        $region55: #{tpu_custom_call.1} parent=39 // pred_region
          %334 = dma.done [#allocation9], 2048
        $region56: #{tpu_custom_call.1} parent=39 // pred_fallthru
          _
        // Predicated region
        $region57: #{tpu_custom_call.1} parent=39 // pred_check
          %p335 = pneg %p146
        $region58: #{tpu_custom_call.1} parent=39 // pred_check_branch
          %337 = sbr.rel (%p335) target = $region60
        $region59: #{tpu_custom_call.1} parent=39 // pred_region
          %338 = dma.done [#allocation9], 256
        $region60: #{tpu_custom_call.1} parent=39 // pred_fallthru
          _
        %s339 = sand.u32 %s39, 1
        %s340 = scalar_lea.sflag [#allocation3], %s339
        %s341 = sand.u32 %s39, 1
        %s342 = smul.addr %s341, 8
        %s343 = scalar_lea.vmem [#allocation2], %s342
        %p344 = pneg %p52
        %p345 = pneg %p49
        %s346 = sand.u32 %s31, 1
        %s347 = scalar_lea.sflag [#allocation6], %s346
        %s348 = sand.u32 %s65, 1
        %s349 = smul.addr %s348, 8
        %s350 = scalar_lea.vmem [#allocation5], %s349
        %p351 = pneg %p78
        %p352 = pneg %p75
        %s353 = sand.u32 %s31, 1
        %s354 = scalar_lea.sflag [#allocation6], %s353
        %s355 = sand.u32 %s91, 1
        %s356 = smul.addr %s355, 8
        %s357 = scalar_lea.vmem [#allocation7], %s356
        %p358 = pneg %p104
        %p359 = pneg %p101
        %p360 = pneg %p125
        %p361 = pneg %p122
        %p362 = pneg %p146
        %p363 = pneg %p143
        %p364 = pneg %p172
        %p365 = pneg %p169
        %s366 = sand.u32 %s159, 1
        %s367 = scalar_lea.sflag [#allocation4], %s366
        %s368 = sand.u32 %s159, 1
        %s369 = smul.addr %s368, 8
        %s370 = scalar_lea.vmem [#allocation11], %s369
        %p371 = pneg %p198
        %p372 = pneg %p195
        %s373 = sand.u32 %s185, 1
        %s374 = scalar_lea.sflag [#allocation13], %s373
        %s375 = sand.u32 %s185, 1
        %s376 = smul.addr %s375, 8
        %s377 = scalar_lea.vmem [#allocation12], %s376
        %v378 = vld [vmem:[%s308] sm:$0xff]
        %v379 = vld [vmem:[%s317] sm:$0xff]
        %v380 = vld [vmem:[%s326] sm:$0xff]
        %v381 = vld [vmem:[#allocation8] sm:$0xff]
        %v382 = vld [vmem:[#allocation8 + $0x8] sm:$0xff]
        %v383 = vld [vmem:[#allocation8 + $0x10] sm:$0xff]
        %v384 = vld [vmem:[#allocation8 + $0x18] sm:$0xff]
        %v385 = vld [vmem:[#allocation8 + $0x20] sm:$0xff]
        %v386 = vld [vmem:[#allocation8 + $0x28] sm:$0xff]
        %v387 = vld [vmem:[#allocation8 + $0x30] sm:$0xff]
        %v388 = vld [vmem:[#allocation8 + $0x38] sm:$0xff]
        %v389 = vld [vmem:[#allocation8 + $0x40] sm:$0xff]
        %v390 = vld [vmem:[#allocation8 + $0x48] sm:$0xff]
        %v391 = vld [vmem:[#allocation8 + $0x50] sm:$0xff]
        %v392 = vld [vmem:[#allocation8 + $0x58] sm:$0xff]
        %v393 = vld [vmem:[#allocation8 + $0x60] sm:$0xff]
        %v394 = vld [vmem:[#allocation8 + $0x68] sm:$0xff]
        %v395 = vld [vmem:[#allocation8 + $0x70] sm:$0xff]
        %v396 = vld [vmem:[#allocation8 + $0x78] sm:$0xff]
        %397 = vmatprep.subr.mxu0 0.0
        %398 = vmatpush1.msra.mxu0 %v381
        %399 = vmatprep.subr.mxu0 0.0
        %400 = vmatpush1.msra.mxu0 %v382
        %401 = vmatprep.subr.mxu0 0.0
        %402 = vmatpush1.msra.mxu0 %v383
        %403 = vmatprep.subr.mxu0 0.0
        %404 = vmatpush1.msra.mxu0 %v384
        %405 = vmatprep.subr.mxu0 0.0
        %406 = vmatpush1.msra.mxu0 %v385
        %407 = vmatprep.subr.mxu0 0.0
        %408 = vmatpush1.msra.mxu0 %v386
        %409 = vmatprep.subr.mxu0 0.0
        %410 = vmatpush1.msra.mxu0 %v387
        %411 = vmatprep.subr.mxu0 0.0
        %412 = vmatpush1.msra.mxu0 %v388
        %413 = vmatprep.subr.mxu0 0.0
        %414 = vmatpush1.msra.mxu0 %v389
        %415 = vmatprep.subr.mxu0 0.0
        %416 = vmatpush1.msra.mxu0 %v390
        %417 = vmatprep.subr.mxu0 0.0
        %418 = vmatpush1.msra.mxu0 %v391
        %419 = vmatprep.subr.mxu0 0.0
        %420 = vmatpush1.msra.mxu0 %v392
        %421 = vmatprep.subr.mxu0 0.0
        %422 = vmatpush1.msra.mxu0 %v393
        %423 = vmatprep.subr.mxu0 0.0
        %424 = vmatpush1.msra.mxu0 %v394
        %425 = vmatprep.subr.mxu0 0.0
        %426 = vmatpush1.msra.mxu0 %v395
        %427 = vmatprep.subr.mxu0 0.0
        %428 = vmatpush1.msra.mxu0 %v396
        %429 = vmatprep.subr.mxu0 0.0
        %430 = vmatpush1.msra.mxu0 0.0
        %431 = vmatprep.subr.mxu0 0.0
        %432 = vmatpush1.msra.mxu0 0.0
        %433 = vmatprep.subr.mxu0 0.0
        %434 = vmatpush1.msra.mxu0 0.0
        %435 = vmatprep.subr.mxu0 0.0
        %436 = vmatpush1.msra.mxu0 0.0
        %437 = vmatprep.subr.mxu0 0.0
        %438 = vmatpush1.msra.mxu0 0.0
        %439 = vmatprep.subr.mxu0 0.0
        %440 = vmatpush1.msra.mxu0 0.0
        %441 = vmatprep.subr.mxu0 0.0
        %442 = vmatpush1.msra.mxu0 0.0
        %443 = vmatprep.subr.mxu0 0.0
        %444 = vmatpush1.msra.mxu0 0.0
        %445 = vmatprep.subr.mxu0 0.0
        %446 = vmatpush1.msra.mxu0 0.0
        %447 = vmatprep.subr.mxu0 0.0
        %448 = vmatpush1.msra.mxu0 0.0
        %449 = vmatprep.subr.mxu0 0.0
        %450 = vmatpush1.msra.mxu0 0.0
        %451 = vmatprep.subr.mxu0 0.0
        %452 = vmatpush1.msra.mxu0 0.0
        %453 = vmatprep.subr.mxu0 0.0
        %454 = vmatpush1.msra.mxu0 0.0
        %455 = vmatprep.subr.mxu0 0.0
        %456 = vmatpush1.msra.mxu0 0.0
        %457 = vmatprep.subr.mxu0 0.0
        %458 = vmatpush1.msra.mxu0 0.0
        %459 = vmatprep.subr.mxu0 0.0
        %460 = vmatpush1.msra.mxu0 0.0
        %461 = vmatprep.mubr.f32.mxu0 0.0
        %462 = vmatmul.mubr.f32.gmra.mrb[0].mxu0 %v379
        %v463 = vpop.f32.mrb[0].mxu0
        %v464 = vadd.f32 0.0, %v463
        %v465 = vpop.f32.mrb[0].mxu0
        %466 = vdwg.mxu0
        %v467 = vld [vmem:[#allocation10] sm:$0xff]
        %v468 = vld [vmem:[#allocation10 + $0x8] sm:$0x1]
        %vm469 = vcmask 72704
        %v471 = vsel %vm469, %v380, 0
        %vm473 = vcmask 1040384
        %v475 = vsel %vm473, %v468, 0
        %477 = vmatprep.subr.mxu0 0.0
        %478 = vmatpush1.msra.mxu0 %v467
        %479 = vmatprep.subr.mxu0 0.0
        %480 = vmatpush1.msra.mxu0 %v475
        %481 = vmatprep.subr.mxu0 0.0
        %482 = vmatpush1.msra.mxu0 0.0
        %483 = vmatprep.subr.mxu0 0.0
        %484 = vmatpush1.msra.mxu0 0.0
        %485 = vmatprep.subr.mxu0 0.0
        %486 = vmatpush1.msra.mxu0 0.0
        %487 = vmatprep.subr.mxu0 0.0
        %488 = vmatpush1.msra.mxu0 0.0
        %489 = vmatprep.subr.mxu0 0.0
        %490 = vmatpush1.msra.mxu0 0.0
        %491 = vmatprep.subr.mxu0 0.0
        %492 = vmatpush1.msra.mxu0 0.0
        %493 = vmatprep.subr.mxu0 0.0
        %494 = vmatpush1.msra.mxu0 0.0
        %495 = vmatprep.subr.mxu0 0.0
        %496 = vmatpush1.msra.mxu0 0.0
        %497 = vmatprep.subr.mxu0 0.0
        %498 = vmatpush1.msra.mxu0 0.0
        %499 = vmatprep.subr.mxu0 0.0
        %500 = vmatpush1.msra.mxu0 0.0
        %501 = vmatprep.subr.mxu0 0.0
        %502 = vmatpush1.msra.mxu0 0.0
        %503 = vmatprep.subr.mxu0 0.0
        %504 = vmatpush1.msra.mxu0 0.0
        %505 = vmatprep.subr.mxu0 0.0
        %506 = vmatpush1.msra.mxu0 0.0
        %507 = vmatprep.subr.mxu0 0.0
        %508 = vmatpush1.msra.mxu0 0.0
        %509 = vmatprep.subr.mxu0 0.0
        %510 = vmatpush1.msra.mxu0 0.0
        %511 = vmatprep.subr.mxu0 0.0
        %512 = vmatpush1.msra.mxu0 0.0
        %513 = vmatprep.subr.mxu0 0.0
        %514 = vmatpush1.msra.mxu0 0.0
        %515 = vmatprep.subr.mxu0 0.0
        %516 = vmatpush1.msra.mxu0 0.0
        %517 = vmatprep.subr.mxu0 0.0
        %518 = vmatpush1.msra.mxu0 0.0
        %519 = vmatprep.subr.mxu0 0.0
        %520 = vmatpush1.msra.mxu0 0.0
        %521 = vmatprep.subr.mxu0 0.0
        %522 = vmatpush1.msra.mxu0 0.0
        %523 = vmatprep.subr.mxu0 0.0
        %524 = vmatpush1.msra.mxu0 0.0
        %525 = vmatprep.subr.mxu0 0.0
        %526 = vmatpush1.msra.mxu0 0.0
        %527 = vmatprep.subr.mxu0 0.0
        %528 = vmatpush1.msra.mxu0 0.0
        %529 = vmatprep.subr.mxu0 0.0
        %530 = vmatpush1.msra.mxu0 0.0
        %531 = vmatprep.subr.mxu0 0.0
        %532 = vmatpush1.msra.mxu0 0.0
        %533 = vmatprep.subr.mxu0 0.0
        %534 = vmatpush1.msra.mxu0 0.0
        %535 = vmatprep.subr.mxu0 0.0
        %536 = vmatpush1.msra.mxu0 0.0
        %537 = vmatprep.subr.mxu0 0.0
        %538 = vmatpush1.msra.mxu0 0.0
        %539 = vmatprep.subr.mxu0 0.0
        %540 = vmatpush1.msra.mxu0 0.0
        %541 = vmatprep.mubr.f32.mxu0 0.0
        %542 = vmatmul.mubr.f32.gmra.mrb[0].mxu0 %v471
        %v543 = vpop.f32.mrb[0].mxu0
        %v544 = vadd.f32 0.0, %v543
        %v545 = vpop.f32.mrb[0].mxu0
        %546 = vdwg.mxu0
        %v547 = vsub.f32 0.0, %v378
        %v548 = vadd.f32 %v547, %v464
        %v549 = vadd.f32 %v548, %v544
        %v550 = vmul.f32 %v549, 0.33333334
        %v551 = vadd.f32 %v378, %v550
        %v552 = vtanh.pop %v551
        %553 = vst [vmem:[%s370] sm:$0xff] %v551
        %554 = vst [vmem:[%s377] sm:$0xff] %v552
        %s555 = sand.u32 %s159, 1
        %s556 = scalar_lea.sflag [#allocation4], %s555
        %s557 = sand.u32 %s159, 1
        %s558 = smul.addr %s557, 8
        %s559 = scalar_lea.vmem [#allocation11], %s558
        %s560 = sand.u32 %s185, 1
        %s561 = scalar_lea.sflag [#allocation13], %s560
        %s562 = sand.u32 %s185, 1
        %s563 = smul.addr %s562, 8
        %s564 = scalar_lea.vmem [#allocation12], %s563
        // Predicated region
        $region61: #{tpu_custom_call.1} parent=39 // pred_check
          %p565 = pneg %p169
        $region62: #{tpu_custom_call.1} parent=39 // pred_check_branch
          %567 = sbr.rel (%p565) target = $region64
        $region63: #{tpu_custom_call.1} parent=39 // pred_region
          %s569 = ssub.s32 128, 128
          %570 = vsyncadd %s556, %s569
          %s571 = smul.addr %s31, 128
          %s572 = scalar_lea.hbm %s5, %s571
          %s574 = sshll.u32 %s559, 4
          %s575 = int_to_ptr.vmem [resolvable:$true] %s574
          %577 = dma.vmem_to_hbm [thread:$0]  %s575, 128, %s572, %s556
        $region64: #{tpu_custom_call.1} parent=39 // pred_fallthru
          _
        // Predicated region
        $region65: #{tpu_custom_call.1} parent=39 // pred_check
          %p578 = pneg %p195
        $region66: #{tpu_custom_call.1} parent=39 // pred_check_branch
          %580 = sbr.rel (%p578) target = $region68
        $region67: #{tpu_custom_call.1} parent=39 // pred_region
          %s582 = ssub.s32 128, 128
          %583 = vsyncadd %s561, %s582
          %s584 = smul.addr %s31, 128
          %s585 = scalar_lea.hbm %s6, %s584
          %s587 = sshll.u32 %s564, 4
          %s588 = int_to_ptr.vmem [resolvable:$true] %s587
          %590 = dma.vmem_to_hbm [thread:$0]  %s588, 128, %s585, %s561
        $region68: #{tpu_custom_call.1} parent=39 // pred_fallthru
          _
      $region40: #{tpu_custom_call.1} parent=5 // pred_fallthru
        _
      %p591 = scmp.le.s32.totalorder 2, %s26
      // Predicated region
      $region69: #{tpu_custom_call.1} parent=5 // pred_check
        %p592 = pneg %p591
      $region70: #{tpu_custom_call.1} parent=5 // pred_check_branch
        %594 = sbr.rel (%p592) target = $region72
      $region71: #{tpu_custom_call.1} parent=5 // pred_region
        %s595 = ssub.s32 %s26, 2
        // Predicated region
        $region73: #{tpu_custom_call.1} parent=71 // pred_check
          %p596 = pneg %p175
        $region74: #{tpu_custom_call.1} parent=71 // pred_check_branch
          %598 = sbr.rel (%p596) target = $region76
        $region75: #{tpu_custom_call.1} parent=71 // pred_region
          %s599 = sand.u32 %s160, 1
          %s600 = scalar_lea.sflag [#allocation4], %s599
          %s601 = sand.u32 %s160, 1
          %s602 = smul.addr %s601, 8
          %s603 = scalar_lea.vmem [#allocation11], %s602
          %604 = dma.done %s600, 128
        $region76: #{tpu_custom_call.1} parent=71 // pred_fallthru
          _
        // Predicated region
        $region77: #{tpu_custom_call.1} parent=71 // pred_check
          %p605 = pneg %p201
        $region78: #{tpu_custom_call.1} parent=71 // pred_check_branch
          %607 = sbr.rel (%p605) target = $region80
        $region79: #{tpu_custom_call.1} parent=71 // pred_region
          %s608 = sand.u32 %s186, 1
          %s609 = scalar_lea.sflag [#allocation13], %s608
          %s610 = sand.u32 %s186, 1
          %s611 = smul.addr %s610, 8
          %s612 = scalar_lea.vmem [#allocation12], %s611
          %613 = dma.done %s609, 128
        $region80: #{tpu_custom_call.1} parent=71 // pred_fallthru
          _
      $region72: #{tpu_custom_call.1} parent=5 // pred_fallthru
        _
    $region6: #{tpu_custom_call.1} parent=1 // loop_footer
      %s30 = sadd.s32 1, %s26
    $region7: #{tpu_custom_call.1} parent=1 // loop_footer_branch
      %25 = sbr.rel target = $region3
    $region8: #{tpu_custom_call.1} parent=1 // loop_exit
      _
    %614 = vsyncpa [#allocation3], 1
    %s615 = scalar_lea.sflag [#allocation3], 1
    %616 = vsyncpa %s615, 1
    %617 = vsyncpa [#allocation6], 1
    %s618 = scalar_lea.sflag [#allocation6], 1
    %619 = vsyncpa %s618, 1
    %620 = vsyncpa [#allocation9], 1
    %621 = vsyncpa [#allocation4], 1
    %s622 = scalar_lea.sflag [#allocation4], 1
    %623 = vsyncpa %s622, 1
    %624 = vsyncpa [#allocation13], 1
    %s625 = scalar_lea.sflag [#allocation13], 1
    %626 = vsyncpa %s625, 1

</llo_original>
